<compile_context>
chip_gen: v5e
topology: v5e:2x2
jax: 0.10.0
libtpu: 0.0.40
codegen_flags: <defaults>
</compile_context>

<pallas_src>
import jax
import jax.numpy as jnp
from jax.experimental import pallas as pl
from jax.experimental.pallas import tpu as pltpu


def _fwa_affine_kernel(ss_ref, x_ref, o_ref):
    """ss_ref: (TR, 2) f32 = [scale | shift]; x_ref / o_ref: (TR, THW)."""
    x = x_ref[...].astype(jnp.float32)
    scale = ss_ref[:, 0:1]
    shift = ss_ref[:, 1:2]
    o_ref[...] = (x * scale + shift).astype(o_ref.dtype)


def _fwa_shift_kernel(sh_ref, x_ref, o_ref):
    """sh_ref: (TR, 1) f32; x_ref / o_ref: (TR, THW)."""
    x = x_ref[...].astype(jnp.float32)
    o_ref[...] = (x + sh_ref[...]).astype(o_ref.dtype)


def _choose_tiles(rows, lanes, itemsize):
    """Pick (row_tile, lane_tile): multiples of (8, 128) (or full smaller
    extent), ~4 MiB per x block, and a grid that shards across 2 TCs."""
    block_bytes = 4 << 20

    # Sublane (row) tile: multiple of 8, capped at 512; full extent if rows < 8.
    tr = rows if rows < 8 else min(512, (rows // 8) * 8)

    # Lane tile: multiple of 128, sized so the x block stays <= ~4 MiB; full
    # extent if the spatial size is below one lane tile.  Trailing partial
    # blocks (rows % tr or lanes % thw) are masked by Pallas.
    if lanes < 128:
        thw = lanes
    else:
        budget = max(128, (block_bytes // (itemsize * tr)) // 128 * 128)
        thw = min((lanes // 128) * 128, budget)

    # v7x: guarantee >= 2 programs on a parallel axis when there is real work,
    # so the grid shards across both TensorCores instead of idling one.
    if (-(-rows // tr) == 1 and -(-lanes // thw) == 1
            and rows * lanes * itemsize > (512 << 10)):
        if thw >= 256:
            thw = (thw // 2) // 128 * 128
        elif tr >= 16:
            tr = (tr // 2) // 8 * 8
    return tr, thw


def feature_wise_affine(x, noise_embed, weight, bias, *, use_affine_level=False,
                        donate_x=False):
    """x: (B, C, H, W) NCHW; noise_embed: (B, in_ch);
    weight: (out_feat, in_ch) torch Linear layout; bias: (out_feat,)."""
    B, C, H, W = x.shape
    out_feat = weight.shape[0]
    assert out_feat == C * (2 if use_affine_level else 1)
    HW = H * W
    R = B * C

    # Hoisted Linear projection (tiny GEMM), computed once in f32 with XLA.
    proj = (
        noise_embed.astype(jnp.float32) @ weight.astype(jnp.float32).T
        + bias.astype(jnp.float32)
    )  # (B, out_feat)

    x2 = x.reshape(R, HW)
    tr, thw = _choose_tiles(R, HW, x2.dtype.itemsize)
    grid = (pl.cdiv(R, tr), pl.cdiv(HW, thw))

    common = dict(
        out_shape=jax.ShapeDtypeStruct((R, HW), x.dtype),
        grid=grid,
        out_specs=pl.BlockSpec((tr, thw), lambda r, s: (r, s)),
        compiler_params=pltpu.CompilerParams(
            dimension_semantics=("parallel", "parallel"),
            vmem_limit_bytes=32 * 1024 * 1024,
        ),
    )
    if donate_x:
        # x2 is input index 1 in both call variants below.
        common["input_output_aliases"] = {1: 0}

    if use_affine_level:
        scale = (1.0 + proj[:, :C]).reshape(R, 1)   # fold "+1" in f32
        shift = proj[:, C:].reshape(R, 1)
        ss = jnp.concatenate([scale, shift], axis=1)          # (R, 2) f32
        out2 = pl.pallas_call(
            _fwa_affine_kernel,
            in_specs=[
                pl.BlockSpec((tr, 2), lambda r, s: (r, 0)),    # scale|shift rows
                pl.BlockSpec((tr, thw), lambda r, s: (r, s)),  # x tile
            ],
            **common,
        )(ss, x2)
    else:
        shift = proj.reshape(R, 1)                             # (R, 1) f32
        out2 = pl.pallas_call(
            _fwa_shift_kernel,
            in_specs=[
                pl.BlockSpec((tr, 1), lambda r, s: (r, 0)),    # shift rows
                pl.BlockSpec((tr, thw), lambda r, s: (r, s)),  # x tile
            ],
            **common,
        )(shift, x2)
    return out2.reshape(B, C, H, W)


def _reference(x, noise_embed, weight, bias, *, use_affine_level=False):
    B, C = x.shape[0], x.shape[1]
    proj = noise_embed @ weight.T + bias            # (B, out_feat)
    proj = proj.reshape(B, -1, 1, 1)
    if use_affine_level:
        gamma, beta = proj[:, :C], proj[:, C:]
        return (1.0 + gamma) * x + beta
    return x + proj


if __name__ == "__main__":
    key = jax.random.PRNGKey(0)
    B, C, H, W = 2, 4, 16, 16
    in_channels = 32

    k1, k2, k3, k4, k5, k6 = jax.random.split(key, 6)
    x = jax.random.normal(k1, (B, C, H, W), dtype=jnp.float32)
    noise_embed = jax.random.normal(k2, (B, in_channels), dtype=jnp.float32)

    # --- use_affine_level = False: Linear(in_channels -> C), shift-only kernel ---
    w_add = jax.random.normal(k3, (C, in_channels), dtype=jnp.float32) * 0.1
    b_add = jax.random.normal(k4, (C,), dtype=jnp.float32) * 0.1
    out_add = feature_wise_affine(
        x, noise_embed, w_add, b_add, use_affine_level=False
    )
    jax.block_until_ready(out_add)
    ref_add = _reference(x, noise_embed, w_add, b_add, use_affine_level=False)
    assert jnp.allclose(out_add, ref_add, atol=1e-5, rtol=1e-5)

    # --- use_affine_level = True: Linear(in_channels -> 2*C), FMA kernel ---
    w_aff = jax.random.normal(k5, (2 * C, in_channels), dtype=jnp.float32) * 0.1
    b_aff = jax.random.normal(k6, (2 * C,), dtype=jnp.float32) * 0.1
    out_aff = feature_wise_affine(
        x, noise_embed, w_aff, b_aff, use_affine_level=True
    )
    jax.block_until_ready(out_aff)
    ref_aff = _reference(x, noise_embed, w_aff, b_aff, use_affine_level=True)
    assert jnp.allclose(out_aff, ref_aff, atol=1e-5, rtol=1e-5)

    print("KERNEL_OK")
</pallas_src>

<mosaic_0001>
module attributes {stable_mosaic.version = 11 : i64} {
  func.func @_fwa_shift_kernel(%arg0: i32, %arg1: i32, %arg2: memref<8x1xf32, #tpu.memory_space<vmem>>, %arg3: memref<8x256xf32, #tpu.memory_space<vmem>>, %arg4: memref<8x256xf32, #tpu.memory_space<vmem>>) attributes {dimension_semantics = [#tpu.dimension_semantics<parallel>, #tpu.dimension_semantics<parallel>], iteration_bounds = array<i64: 1, 1>, scalar_prefetch = 0 : i64, scratch_operands = 0 : i64, tpu.core_type = #tpu.core_type<tc>, window_params = [{transform_indices = @transform_0, window_bounds = array<i64: 8, 1>}, {transform_indices = @transform_1, window_bounds = array<i64: 8, 256>}, {transform_indices = @transform_2, window_bounds = array<i64: 8, 256>}]} {
    %c0 = arith.constant 0 : index
    %c0_0 = arith.constant 0 : index
    %0 = vector.load %arg3[%c0, %c0_0] : memref<8x256xf32, #tpu.memory_space<vmem>>, vector<8x256xf32>
    %c0_1 = arith.constant 0 : index
    %c0_2 = arith.constant 0 : index
    %1 = vector.load %arg2[%c0_1, %c0_2] : memref<8x1xf32, #tpu.memory_space<vmem>>, vector<8x1xf32>
    %2 = vector.broadcast %1 : vector<8x1xf32> to vector<8x256xf32>
    %3 = arith.addf %0, %2 : vector<8x256xf32>
    %c0_3 = arith.constant 0 : index
    %c0_4 = arith.constant 0 : index
    %4 = vector.load %arg4[%c0_3, %c0_4] : memref<8x256xf32, #tpu.memory_space<vmem>>, vector<8x256xf32>
    tpu.vector_store %arg4[%c0_3, %c0_4], %3 {strides = array<i32>} : memref<8x256xf32, #tpu.memory_space<vmem>>, vector<8x256xf32>,
    return
  }
  func.func @transform_0(%arg0: i32, %arg1: i32) -> (i32, i32) {
    %c0_i32 = arith.constant 0 : i32
    %c0_i32_0 = arith.constant 0 : i32
    return %arg0, %c0_i32 : i32, i32
  }
  func.func @transform_1(%arg0: i32, %arg1: i32) -> (i32, i32) {
    %c0_i32 = arith.constant 0 : i32
    return %arg0, %arg1 : i32, i32
  }
  func.func @transform_2(%arg0: i32, %arg1: i32) -> (i32, i32) {
    %c0_i32 = arith.constant 0 : i32
    return %arg0, %arg1 : i32, i32
  }
}

</mosaic_0001>

<llo_original>
// kernel: tpu_custom_call.1
$region0: #{tpu_custom_call.1}
  #allocation0 [shape = 'u32[]', space=smem, size = 0x4, offset = 0x4, fixed_abs, tag = 'smem constant byte address 0x4 - core index']
  #allocation1 [shape = 'u32[72,128]{1,0:T(1,128)}', space=vmem, size = 0x9000, scoped, tag = 'internal scratch']
  %s0 = inlined_call_operand.vmem [shape: f32[8,1], index: 0, kind: input, shape index: {}]
  %s1 = inlined_call_operand.hbm [shape: f32[8,256], index: 1, kind: input, shape index: {}]
  %s2 = inlined_call_operand.hbm [shape: f32[8,256], index: 2, kind: output, shape index: {}]
  %s3 = sld [smem:[#allocation0]]
  $region22: #{tpu_custom_call.1} parent=0
    _
  %s5 = ssub.s32 1, %s3
  %s6 = scalar_select 0, %s5, %s3
  $region1: #{tpu_custom_call.1} parent=0
    #allocation2 [shape = 'u8[8192]{0}', space=vmem, size = 0x2000, scoped, tag = 'input window, operand 1, single buffered']
    #allocation3 [shape = 's32[1]{0}', space=sflag, size = 0x4, scoped, tag = 'scoped memory for tpu_custom_call.1']
    #allocation4 [shape = 's32[1]{0}', space=sflag, size = 0x4, scoped, tag = 'scoped memory for tpu_custom_call.1']
    #allocation5 [shape = 'u8[8192]{0}', space=vmem, size = 0x2000, scoped, tag = 'output window, operand 0, single buffered']
    %7 = vsyncpa [#allocation3], 0
    %8 = vsyncpa [#allocation4], 0
    // Predicated region
    $region2: #{tpu_custom_call.1} parent=1 // pred_check
      _
    $region3: #{tpu_custom_call.1} parent=1 // pred_check_branch
      %10 = sbr.rel (0) target = $region5
    $region4: #{tpu_custom_call.1} parent=1 // pred_region
      _
    $region5: #{tpu_custom_call.1} parent=1 // pred_fallthru
      _
    // Predicated region
    $region6: #{tpu_custom_call.1} parent=1 // pred_check
      _
    $region7: #{tpu_custom_call.1} parent=1 // pred_check_branch
      %12 = sbr.rel (0) target = $region9
    $region8: #{tpu_custom_call.1} parent=1 // pred_region
      %14 = vsyncadd [#allocation3], 0
      %s16 = sshll.u32 %s1, 4
      %s17 = int_to_ptr.hbm [resolvable:$true] %s16
      %s18 = sshll.u32 [#allocation2], 4
      %s19 = int_to_ptr.vmem [resolvable:$true] %s18
      %21 = dma.hbm_to_vmem [thread:$0]  %s17, 256, %s19, [#allocation3]
    $region9: #{tpu_custom_call.1} parent=1 // pred_fallthru
      _
    // Predicated region
    $region10: #{tpu_custom_call.1} parent=1 // pred_check
      _
    $region11: #{tpu_custom_call.1} parent=1 // pred_check_branch
      %23 = sbr.rel (0) target = $region13
    $region12: #{tpu_custom_call.1} parent=1 // pred_region
      %25 = dma.done [#allocation3], 256
    $region13: #{tpu_custom_call.1} parent=1 // pred_fallthru
      _
    %v26 = vld [vmem:[#allocation2] sm:$0xff]
    %v27 = vld [vmem:[#allocation2 + $0x8] sm:$0xff]
    %v28 = vld [vmem:[%s0] sm:$0xff]
    %30 = vset.pattern.permute.xlu0 0
    %31 = vperm.xlu0 %30, %v28
    %v32 = vpop.permute.xlu0 %31
    %v34 = vadd.f32 %v26, %v32
    %v35 = vadd.f32 %v27, %v32
    %36 = vst [vmem:[#allocation5] sm:$0xff] %v34
    %37 = vst [vmem:[#allocation5 + $0x8] sm:$0xff] %v35
    // Predicated region
    $region14: #{tpu_custom_call.1} parent=1 // pred_check
      _
    $region15: #{tpu_custom_call.1} parent=1 // pred_check_branch
      %39 = sbr.rel (0) target = $region17
    $region16: #{tpu_custom_call.1} parent=1 // pred_region
      %41 = vsyncadd [#allocation4], 0
      %s43 = sshll.u32 [#allocation5], 4
      %s44 = int_to_ptr.vmem [resolvable:$true] %s43
      %s45 = sshll.u32 %s2, 4
      %s46 = int_to_ptr.hbm [resolvable:$true] %s45
      %48 = dma.vmem_to_hbm [thread:$0]  %s44, 256, %s46, [#allocation4]
    $region17: #{tpu_custom_call.1} parent=1 // pred_fallthru
      _
    // Predicated region
    $region18: #{tpu_custom_call.1} parent=1 // pred_check
      _
    $region19: #{tpu_custom_call.1} parent=1 // pred_check_branch
      %50 = sbr.rel (0) target = $region21
    $region20: #{tpu_custom_call.1} parent=1 // pred_region
      %52 = dma.done [#allocation4], 256
    $region21: #{tpu_custom_call.1} parent=1 // pred_fallthru
      _
    %53 = vsyncpa [#allocation3], 1
    %54 = vsyncpa [#allocation4], 1

</llo_original>
